<compile_context>
chip_gen: v5e
topology: v5e:2x2
jax: 0.10.0
libtpu: 0.0.40
codegen_flags: <defaults>
</compile_context>

<pallas_src>
import functools

import jax
import jax.numpy as jnp
from jax.experimental import pallas as pl
from jax.experimental.pallas import tpu as pltpu


def _round_up(a, b):
    return (a + b - 1) // b * b


_VMEM_BLOCK_BUDGET = 8 * 1024 * 1024   # per-block working-set target (bytes)
_VMEM_LIMIT = 32 * 1024 * 1024         # scoped VMEM limit (fits v5e/v6e/v7x)
_GRAPH_CHUNK = 512                     # phase-2 one-hot chunk width (graphs)


def _attn_weighted(x, w_row, bias):
    """sigmoid(x @ w + b) * x, with the 1-column 'matmul' done on the VPU/XLU."""
    logits = jnp.sum(x * w_row, axis=-1, keepdims=True) + bias   # [rows, 1]
    return x * jax.nn.sigmoid(logits)


# ---------------------------------------------------------------------------
# Fused single-pass kernel (whole graph batch fits in one VMEM block).
# ---------------------------------------------------------------------------
def fused_kernel(x_ref, batch_row_ref, batch_col_ref, w_ref, b_ref, ctx_ref, *,
                 b_pad):
    x = x_ref[...].astype(jnp.float32)                           # [rows, C]
    w_row = w_ref[...].astype(jnp.float32)                       # [1, C]
    weighted = _attn_weighted(x, w_row, b_ref[0, 0])             # [rows, C]
    rows = x.shape[0]

    # per-graph weighted sums + counts via transposed one-hot (MXU + lane reduce)
    gids_t = jax.lax.broadcasted_iota(jnp.int32, (b_pad, rows), 0)
    oh_t = (gids_t == batch_row_ref[...]).astype(jnp.float32)    # [B, rows]
    sums = jnp.dot(oh_t, weighted, preferred_element_type=jnp.float32)
    counts = jnp.sum(oh_t, axis=1, keepdims=True)                # [B, 1]
    means = sums / jnp.maximum(counts, 1.0)                      # exact division

    # scatter per-graph means back to nodes (one-hot gather on the MXU)
    gids = jax.lax.broadcasted_iota(jnp.int32, (rows, b_pad), 1)
    oh = (batch_col_ref[...] == gids).astype(jnp.float32)        # [rows, B]
    ctx_ref[...] = jnp.dot(oh, means,
                           preferred_element_type=jnp.float32).astype(ctx_ref.dtype)


# ---------------------------------------------------------------------------
# Phase 1: per-graph attention-weighted sums + node counts (accumulator pass).
# Grid = (split, inner); outputs are per-split partials so both v7x TCs work.
# ---------------------------------------------------------------------------
def pool_kernel(x_ref, batch_row_ref, w_ref, b_ref, sums_ref, counts_ref):
    @pl.when(pl.program_id(1) == 0)
    def _init():
        sums_ref[...] = jnp.zeros_like(sums_ref)
        counts_ref[...] = jnp.zeros_like(counts_ref)

    x = x_ref[...].astype(jnp.float32)                           # [tile_n, C]
    w_row = w_ref[...].astype(jnp.float32)                       # [1, C]
    weighted = _attn_weighted(x, w_row, b_ref[0, 0])

    b_pad = sums_ref.shape[1]
    tile_n = x.shape[0]
    # transposed one-hot [B, tile_n]; padded rows carry batch id -1 -> all zero
    gids_t = jax.lax.broadcasted_iota(jnp.int32, (b_pad, tile_n), 0)
    oh_t = (gids_t == batch_row_ref[...]).astype(jnp.float32)

    sums_ref[...] += jnp.dot(oh_t, weighted,
                             preferred_element_type=jnp.float32)[None]
    counts_ref[...] += jnp.sum(oh_t, axis=1, keepdims=True)[None]


# ---------------------------------------------------------------------------
# Phase 2: per-node context gather.  Emits ONLY ctx (no x pass-through).
# ---------------------------------------------------------------------------
def gather_kernel(batch_col_ref, sums_ref, counts_ref, ctx_ref, *, graph_chunk):
    batch_col = batch_col_ref[...]                               # [tile_n, 1]
    tile_n = batch_col.shape[0]
    b_pad, c = sums_ref.shape

    if b_pad <= graph_chunk:
        means = sums_ref[...] / jnp.maximum(counts_ref[...], 1.0)
        gids = jax.lax.broadcasted_iota(jnp.int32, (tile_n, b_pad), 1)
        oh = (batch_col == gids).astype(jnp.float32)
        ctx = jnp.dot(oh, means, preferred_element_type=jnp.float32)
    else:
        # chunk the one-hot over graph blocks to bound VMEM (no giant [tile_n,B])
        def body(ci, acc):
            off = pl.multiple_of(ci * graph_chunk, graph_chunk)
            s = sums_ref[pl.ds(off, graph_chunk), :]
            cnt = counts_ref[pl.ds(off, graph_chunk), :]
            m = s / jnp.maximum(cnt, 1.0)
            gids = (jax.lax.broadcasted_iota(
                jnp.int32, (tile_n, graph_chunk), 1) + off)
            oh = (batch_col == gids).astype(jnp.float32)
            return acc + jnp.dot(oh, m, preferred_element_type=jnp.float32)

        ctx = jax.lax.fori_loop(0, b_pad // graph_chunk, body,
                                jnp.zeros((tile_n, c), jnp.float32))

    ctx_ref[...] = ctx.astype(ctx_ref.dtype)


# ---------------------------------------------------------------------------
# Wrapper: tiling decisions, padding, dispatch fused vs. two-phase.
# ---------------------------------------------------------------------------
def global_attention_layer(x, batch, w, b, *, num_graphs,
                           max_block_rows=4096, storage_dtype=jnp.float32):
    """x: [N, C], batch: [N] int, w: [C] or [C,1], b: scalar -> [N, 2C]."""
    x = jnp.asarray(x)
    n, c = x.shape
    out_dtype = x.dtype

    b_pad = _round_up(max(num_graphs, 1), 8)
    if b_pad > _GRAPH_CHUNK:
        b_pad = _round_up(b_pad, _GRAPH_CHUNK)

    # adaptive node-block rows from the per-block VMEM budget (x, weighted, ctx,
    # one-hot + iota, slack) -- grows to max_block_rows when C / num_graphs small
    per_row_bytes = 4 * (3 * c + 3 * b_pad + 16)
    rows_cap = max(8, min(max_block_rows, _VMEM_BLOCK_BUDGET // per_row_bytes))
    rows_cap = max(8, rows_cap // 8 * 8)

    w_row = jnp.asarray(w, jnp.float32).reshape(1, c)
    b2d = jnp.asarray(b, jnp.float32).reshape(1, 1)
    batch_i32 = jnp.asarray(batch, jnp.int32)

    fused = _round_up(n, 8) <= rows_cap
    if fused:
        tile_n = _round_up(n, 8)
        n_pad = tile_n
        num_blocks = 1
    else:
        # multi-block: tile_n must be a multiple of 128 (batch_row lane dim)
        tile_n = max(128, rows_cap // 128 * 128)
        n_pad = _round_up(n, tile_n)
        num_blocks = n_pad // tile_n

    # pad rows only when needed; pad rows get batch id -1 (all-zero one-hot)
    x_store = x.astype(storage_dtype)
    if n_pad != n:
        x_store = jnp.zeros((n_pad, c), storage_dtype).at[:n].set(x_store)
        batch_i32 = jnp.full((n_pad,), -1, jnp.int32).at[:n].set(batch_i32)
    batch_row = batch_i32.reshape(1, n_pad)
    batch_col = batch_i32.reshape(n_pad, 1)

    if fused:
        ctx_pad = pl.pallas_call(
            functools.partial(fused_kernel, b_pad=b_pad),
            out_shape=jax.ShapeDtypeStruct((n_pad, c), jnp.float32),
            grid=(1,),
            in_specs=[
                pl.BlockSpec((n_pad, c), lambda i: (0, 0)),
                pl.BlockSpec((1, n_pad), lambda i: (0, 0)),
                pl.BlockSpec((n_pad, 1), lambda i: (0, 0)),
                pl.BlockSpec((1, c), lambda i: (0, 0)),
                pl.BlockSpec(memory_space=pltpu.MemorySpace.SMEM),
            ],
            out_specs=pl.BlockSpec((n_pad, c), lambda i: (0, 0)),
            compiler_params=pltpu.CompilerParams(
                dimension_semantics=("arbitrary",),
                vmem_limit_bytes=_VMEM_LIMIT),
        )(x_store, batch_row, batch_col, w_row, b2d)
    else:
        # ---- phase 1: per-graph sums + counts, 2-way split when possible ----
        split = 2 if num_blocks % 2 == 0 else 1
        inner = num_blocks // split
        part_sums, part_counts = pl.pallas_call(
            pool_kernel,
            out_shape=(jax.ShapeDtypeStruct((split, b_pad, c), jnp.float32),
                       jax.ShapeDtypeStruct((split, b_pad, 1), jnp.float32)),
            grid=(split, inner),
            in_specs=[
                pl.BlockSpec((tile_n, c), lambda s, i: (s * inner + i, 0)),
                pl.BlockSpec((1, tile_n), lambda s, i: (0, s * inner + i)),
                pl.BlockSpec((1, c), lambda s, i: (0, 0)),
                pl.BlockSpec(memory_space=pltpu.MemorySpace.SMEM),
            ],
            out_specs=(pl.BlockSpec((1, b_pad, c), lambda s, i: (s, 0, 0)),
                       pl.BlockSpec((1, b_pad, 1), lambda s, i: (s, 0, 0))),
            compiler_params=pltpu.CompilerParams(
                dimension_semantics=("parallel", "arbitrary"),
                vmem_limit_bytes=_VMEM_LIMIT),
        )(x_store, batch_row, w_row, b2d)

        sums = part_sums.sum(axis=0)          # tiny [B, C] reduction of partials
        counts = part_counts.sum(axis=0)

        # ---- phase 2: gather per-node context (independent node blocks) -----
        ctx_pad = pl.pallas_call(
            functools.partial(gather_kernel, graph_chunk=_GRAPH_CHUNK),
            out_shape=jax.ShapeDtypeStruct((n_pad, c), jnp.float32),
            grid=(num_blocks,),
            in_specs=[
                pl.BlockSpec((tile_n, 1), lambda i: (i, 0)),
                pl.BlockSpec((b_pad, c), lambda i: (0, 0)),
                pl.BlockSpec((b_pad, 1), lambda i: (0, 0)),
            ],
            out_specs=pl.BlockSpec((tile_n, c), lambda i: (i, 0)),
            compiler_params=pltpu.CompilerParams(
                dimension_semantics=("parallel",),
                vmem_limit_bytes=_VMEM_LIMIT),
        )(batch_col, sums, counts)

    ctx = ctx_pad if n_pad == n else ctx_pad[:n]
    # final [x | ctx] built from the ORIGINAL x (kernels never re-emit x)
    return jnp.concatenate([x, ctx.astype(out_dtype)], axis=-1)


# ---------------------------------------------------------------------------
# Pure-JAX reference mirroring the PyTorch module.
# ---------------------------------------------------------------------------
def _reference(x, batch, w, b, num_graphs):
    logits = x @ w.reshape(-1, 1) + b
    attn = jax.nn.sigmoid(logits)
    weighted = x * attn
    sums = jax.ops.segment_sum(weighted, batch, num_segments=num_graphs)
    counts = jax.ops.segment_sum(jnp.ones((x.shape[0], 1), x.dtype), batch,
                                 num_segments=num_graphs)
    means = sums / jnp.maximum(counts, 1.0)
    return jnp.concatenate([x, means[batch]], axis=-1)


if __name__ == "__main__":
    key = jax.random.PRNGKey(0)
    k_x, k_w, k_b, k_x2 = jax.random.split(key, 4)

    # small shapes consistent with the module: N=16 nodes, C=8 channels, 2 graphs
    N, C, NUM_GRAPHS = 16, 8, 2
    x = jax.random.normal(k_x, (N, C), dtype=jnp.float32)
    batch = jnp.array([0] * 7 + [1] * 9, dtype=jnp.int32)   # uneven graph sizes

    # deterministic nn.Linear(in_channels, 1) init: U(-1/sqrt(C), 1/sqrt(C))
    bound = 1.0 / jnp.sqrt(jnp.asarray(C, jnp.float32))
    w = jax.random.uniform(k_w, (C,), jnp.float32, -bound, bound)
    b = jax.random.uniform(k_b, (), jnp.float32, -bound, bound)

    out = global_attention_layer(x, batch, w, b, num_graphs=NUM_GRAPHS)
    out = jax.block_until_ready(out)
    ref = _reference(x, batch, w, b, NUM_GRAPHS)
    assert out.shape == (N, 2 * C)
    assert jnp.allclose(out, ref, atol=1e-5, rtol=1e-5), "fused path mismatch"

    # also exercise the two-phase tiled path (row padding, 2-way phase-1 split)
    N2, G2 = 450, 3
    x2 = jax.random.normal(k_x2, (N2, C), dtype=jnp.float32)
    batch2 = jnp.concatenate(
        [jnp.full((150,), g, jnp.int32) for g in range(G2)])
    out2 = global_attention_layer(x2, batch2, w, b, num_graphs=G2,
                                  max_block_rows=128)
    out2 = jax.block_until_ready(out2)
    ref2 = _reference(x2, batch2, w, b, G2)
    assert out2.shape == (N2, 2 * C)
    assert jnp.allclose(out2, ref2, atol=1e-5, rtol=1e-5), "tiled path mismatch"

    print("KERNEL_OK")
</pallas_src>

<mosaic_0001>
module attributes {stable_mosaic.version = 11 : i64} {
  func.func @fused_kernel(%arg0: i32, %arg1: memref<16x8xf32, #tpu.memory_space<vmem>>, %arg2: memref<1x16xi32, #tpu.memory_space<vmem>>, %arg3: memref<16x1xi32, #tpu.memory_space<vmem>>, %arg4: memref<1x8xf32, #tpu.memory_space<vmem>>, %arg5: memref<1x1xf32, #tpu.memory_space<smem>>, %arg6: memref<16x8xf32, #tpu.memory_space<vmem>>) attributes {dimension_semantics = [#tpu.dimension_semantics<arbitrary>], iteration_bounds = array<i64: 1>, scalar_prefetch = 0 : i64, scratch_operands = 0 : i64, tpu.core_type = #tpu.core_type<tc>, window_params = [{pipeline_mode = #tpu.pipeline_mode<synchronous>, transform_indices = @transform_0, window_bounds = array<i64: 16, 8>}, {pipeline_mode = #tpu.pipeline_mode<synchronous>, transform_indices = @transform_1, window_bounds = array<i64: 1, 16>}, {pipeline_mode = #tpu.pipeline_mode<synchronous>, transform_indices = @transform_2, window_bounds = array<i64: 16, 1>}, {pipeline_mode = #tpu.pipeline_mode<synchronous>, transform_indices = @transform_3, window_bounds = array<i64: 1, 8>}, {transform_indices = @transform_4, window_bounds = array<i64: 1, 1>}, {pipeline_mode = #tpu.pipeline_mode<synchronous>, transform_indices = @transform_5, window_bounds = array<i64: 16, 8>}]} {
    %c0 = arith.constant 0 : index
    %c0_0 = arith.constant 0 : index
    %0 = vector.load %arg1[%c0, %c0_0] : memref<16x8xf32, #tpu.memory_space<vmem>>, vector<16x8xf32>
    %c0_1 = arith.constant 0 : index
    %c0_2 = arith.constant 0 : index
    %1 = vector.load %arg4[%c0_1, %c0_2] : memref<1x8xf32, #tpu.memory_space<vmem>>, vector<1x8xf32>
    %c0_3 = arith.constant 0 : index
    %c0_4 = arith.constant 0 : index
    %2 = memref.load %arg5[%c0_3, %c0_4] : memref<1x1xf32, #tpu.memory_space<smem>>
    %3 = vector.broadcast %1 : vector<1x8xf32> to vector<16x8xf32>
    %4 = arith.mulf %0, %3 : vector<16x8xf32>
    %cst = arith.constant dense<0.000000e+00> : vector<16xf32>
    %5 = vector.multi_reduction <add>, %4, %cst [1] : vector<16x8xf32> to vector<16xf32>
    %6 = vector.shape_cast %5 : vector<16xf32> to vector<16x1xf32>
    %7 = vector.broadcast %2 : f32 to vector<16x1xf32>
    %8 = arith.addf %6, %7 : vector<16x1xf32>
    %9 = arith.negf %8 : vector<16x1xf32>
    %10 = math.exp %9 : vector<16x1xf32>
    %cst_5 = arith.constant 1.000000e+00 : f32
    %11 = vector.broadcast %cst_5 : f32 to vector<16x1xf32>
    %12 = arith.addf %11, %10 : vector<16x1xf32>
    %13 = arith.divf %11, %12 : vector<16x1xf32>
    %14 = vector.broadcast %13 : vector<16x1xf32> to vector<16x8xf32>
    %15 = arith.mulf %0, %14 : vector<16x8xf32>
    %16 = tpu.iota {dimensions = array<i32: 0>} : vector<8x16xi32>
    %c0_6 = arith.constant 0 : index
    %c0_7 = arith.constant 0 : index
    %17 = vector.load %arg2[%c0_6, %c0_7] : memref<1x16xi32, #tpu.memory_space<vmem>>, vector<1x16xi32>
    %18 = vector.broadcast %17 : vector<1x16xi32> to vector<8x16xi32>
    %19 = arith.cmpi eq, %16, %18 : vector<8x16xi32>
    %20 = arith.extui %19 : vector<8x16xi1> to vector<8x16xi32>
    %21 = arith.sitofp %20 : vector<8x16xi32> to vector<8x16xf32>
    %cst_8 = arith.constant dense<0.000000e+00> : vector<8x8xf32>
    %22 = tpu.matmul %21, %15, %cst_8 {dimension_numbers = #tpu.dot_dimension_numbers<[1], [0], [0], [1], [0, 0, 1, 1], [], []>} : vector<8x16xf32>, vector<16x8xf32>, vector<8x8xf32> -> vector<8x8xf32>
    %cst_9 = arith.constant dense<0.000000e+00> : vector<8xf32>
    %23 = vector.multi_reduction <add>, %21, %cst_9 [1] : vector<8x16xf32> to vector<8xf32>
    %24 = vector.shape_cast %23 : vector<8xf32> to vector<8x1xf32>
    %cst_10 = arith.constant 1.000000e+00 : f32
    %25 = vector.broadcast %cst_10 : f32 to vector<8x1xf32>
    %26 = arith.maximumf %24, %25 : vector<8x1xf32>
    %27 = vector.broadcast %26 : vector<8x1xf32> to vector<8x8xf32>
    %28 = arith.divf %22, %27 : vector<8x8xf32>
    %29 = tpu.iota {dimensions = array<i32: 1>} : vector<16x8xi32>
    %c0_11 = arith.constant 0 : index
    %c0_12 = arith.constant 0 : index
    %30 = vector.load %arg3[%c0_11, %c0_12] : memref<16x1xi32, #tpu.memory_space<vmem>>, vector<16x1xi32>
    %31 = vector.broadcast %30 : vector<16x1xi32> to vector<16x8xi32>
    %32 = arith.cmpi eq, %31, %29 : vector<16x8xi32>
    %33 = arith.extui %32 : vector<16x8xi1> to vector<16x8xi32>
    %34 = arith.sitofp %33 : vector<16x8xi32> to vector<16x8xf32>
    %cst_13 = arith.constant dense<0.000000e+00> : vector<16x8xf32>
    %35 = tpu.matmul %34, %28, %cst_13 {dimension_numbers = #tpu.dot_dimension_numbers<[1], [0], [0], [1], [0, 0, 1, 1], [], []>} : vector<16x8xf32>, vector<8x8xf32>, vector<16x8xf32> -> vector<16x8xf32>
    %c0_14 = arith.constant 0 : index
    %c0_15 = arith.constant 0 : index
    %36 = vector.load %arg6[%c0_14, %c0_15] : memref<16x8xf32, #tpu.memory_space<vmem>>, vector<16x8xf32>
    tpu.vector_store %arg6[%c0_14, %c0_15], %35 {strides = array<i32>} : memref<16x8xf32, #tpu.memory_space<vmem>>, vector<16x8xf32>,
    return
  }
  func.func @transform_0(%arg0: i32) -> (i32, i32) {
    %c0_i32 = arith.constant 0 : i32
    %c0_i32_0 = arith.constant 0 : i32
    %c0_i32_1 = arith.constant 0 : i32
    return %c0_i32, %c0_i32_0 : i32, i32
  }
  func.func @transform_1(%arg0: i32) -> (i32, i32) {
    %c0_i32 = arith.constant 0 : i32
    %c0_i32_0 = arith.constant 0 : i32
    %c0_i32_1 = arith.constant 0 : i32
    return %c0_i32, %c0_i32_0 : i32, i32
  }
  func.func @transform_2(%arg0: i32) -> (i32, i32) {
    %c0_i32 = arith.constant 0 : i32
    %c0_i32_0 = arith.constant 0 : i32
    %c0_i32_1 = arith.constant 0 : i32
    return %c0_i32, %c0_i32_0 : i32, i32
  }
  func.func @transform_3(%arg0: i32) -> (i32, i32) {
    %c0_i32 = arith.constant 0 : i32
    %c0_i32_0 = arith.constant 0 : i32
    %c0_i32_1 = arith.constant 0 : i32
    return %c0_i32, %c0_i32_0 : i32, i32
  }
  func.func @transform_4(%arg0: i32) -> (i32, i32) {
    %c0_i32 = arith.constant 0 : i32
    %c0_i32_0 = arith.constant 0 : i32
    %c0_i32_1 = arith.constant 0 : i32
    return %c0_i32, %c0_i32_0 : i32, i32
  }
  func.func @transform_5(%arg0: i32) -> (i32, i32) {
    %c0_i32 = arith.constant 0 : i32
    %c0_i32_0 = arith.constant 0 : i32
    %c0_i32_1 = arith.constant 0 : i32
    return %c0_i32, %c0_i32_0 : i32, i32
  }
}

</mosaic_0001>

<llo_original>
// kernel: tpu_custom_call.1
$region0: #{tpu_custom_call.1}
  #allocation0 [shape = 'u32[]', space=smem, size = 0x4, offset = 0x4, fixed_abs, tag = 'smem constant byte address 0x4 - core index']
  #allocation1 [shape = 'u32[72,128]{1,0:T(1,128)}', space=vmem, size = 0x9000, scoped, tag = 'internal scratch']
  #allocation2 [shape = 'f32[1,1]{1,0:T(1,128)S(6)}', space=smem, size = 0x200, scoped, tag = 'scoped memory for tpu_custom_call.1']
  %s0 = inlined_call_operand.vmem [shape: f32[16,8], index: 0, kind: input, shape index: {}]
  %s1 = inlined_call_operand.vmem [shape: s32[1,16], index: 1, kind: input, shape index: {}]
  %s2 = inlined_call_operand.vmem [shape: s32[16,1], index: 2, kind: input, shape index: {}]
  %s3 = inlined_call_operand.vmem [shape: f32[1,8], index: 3, kind: input, shape index: {}]
  %s4 = inlined_call_operand.<no memory space> [shape: f32[1,1], index: 4, kind: input, shape index: {}]
  %s5 = inlined_call_operand.vmem [shape: f32[16,8], index: 5, kind: output, shape index: {}]
  %s6 = sld [smem:[#allocation0]]
  $region30: #{tpu_custom_call.1} parent=0
    _
  %s8 = ssub.s32 1, %s6
  %s9 = scalar_select 0, %s8, %s6
  %10 = sst [smem:[#allocation2]] %s4
  // Predicated region
  $region2: #{tpu_custom_call.1} parent=0 // pred_check
    _
  $region3: #{tpu_custom_call.1} parent=0 // pred_check_branch
    %12 = sbr.rel (0) target = $region5
  $region4: #{tpu_custom_call.1} parent=0 // pred_region
    _
  $region5: #{tpu_custom_call.1} parent=0 // pred_fallthru
    _
  // Predicated region
  $region6: #{tpu_custom_call.1} parent=0 // pred_check
    _
  $region7: #{tpu_custom_call.1} parent=0 // pred_check_branch
    %14 = sbr.rel (0) target = $region9
  $region8: #{tpu_custom_call.1} parent=0 // pred_region
    _
  $region9: #{tpu_custom_call.1} parent=0 // pred_fallthru
    _
  // Predicated region
  $region10: #{tpu_custom_call.1} parent=0 // pred_check
    _
  $region11: #{tpu_custom_call.1} parent=0 // pred_check_branch
    %16 = sbr.rel (0) target = $region13
  $region12: #{tpu_custom_call.1} parent=0 // pred_region
    _
  $region13: #{tpu_custom_call.1} parent=0 // pred_fallthru
    _
  // Predicated region
  $region14: #{tpu_custom_call.1} parent=0 // pred_check
    _
  $region15: #{tpu_custom_call.1} parent=0 // pred_check_branch
    %18 = sbr.rel (0) target = $region17
  $region16: #{tpu_custom_call.1} parent=0 // pred_region
    _
  $region17: #{tpu_custom_call.1} parent=0 // pred_fallthru
    _
  // Predicated region
  $region18: #{tpu_custom_call.1} parent=0 // pred_check
    _
  $region19: #{tpu_custom_call.1} parent=0 // pred_check_branch
    %20 = sbr.rel (0) target = $region21
  $region20: #{tpu_custom_call.1} parent=0 // pred_region
    _
  $region21: #{tpu_custom_call.1} parent=0 // pred_fallthru
    _
  %v21 = vld [vmem:[%s0] sm:$0xff]
  %v22 = vld [vmem:[%s0 + $0x8] sm:$0xff]
  %v23 = vld [vmem:[%s3] sm:$0x1]
  %s24 = sld [smem:[#allocation2]]
  %v26 = vperm.slane %v23, 0
  %v28 = vmul.f32 %v21, %v26
  %v29 = vmul.f32 %v22, %v26
  %vm30 = vcmask 64512
  %v31 = vsel %vm30, %v28, 0.0
  %32 = vadd.xlane.f32.xlu0 %v31
  %v33 = vpop.xlane.xlu0 %32
  %v34 = vsel %vm30, %v29, 0.0
  %35 = vadd.xlane.f32.xlu0 %v34
  %v36 = vpop.xlane.xlu0 %35
  %v37 = vstv %s24
  %v38 = vadd.f32 %v33, %v37
  %v39 = vadd.f32 %v36, %v37
  %v40 = vxor.u32 %v38, 2147483648
  %v41 = vxor.u32 %v39, 2147483648
  %v42 = vmul.f32 %v40, 1.442695
  %v43 = vpow.pop %v42
  %v44 = vmul.f32 %v41, 1.442695
  %v45 = vpow.pop %v44
  %v46 = vadd.f32 %v43, 1.0
  %v47 = vadd.f32 %v45, 1.0
  %v48 = vrcp.pop %v46
  %v49 = vmul.f32 %v46, %v48
  %v50 = vsub.f32 1.0, %v49
  %v51 = vmul.f32 %v48, %v50
  %v52 = vadd.f32 %v48, %v51
  %vm53 = vweird.f32 %v46
  %vm54 = vweird.f32 %v48
  %vm55 = vmor %vm53, %vm54
  %v56 = vsel %vm55, %v48, %v52
  %v57 = vand.u32 2147483647, %v46
  %vm58 = vcmp.eq.f32.partialorder %v57, 8.507059e+37
  %v59 = vand.u32 %v46, 2147483648
  %v60 = vor.u32 1.1754944e-38, %v59
  %v61 = vsel %vm58, %v60, %v56
  %v62 = vmul.f32 1.0, %v61
  %v63 = vrcp.pop %v47
  %v64 = vmul.f32 %v47, %v63
  %v65 = vsub.f32 1.0, %v64
  %v66 = vmul.f32 %v63, %v65
  %v67 = vadd.f32 %v63, %v66
  %vm68 = vweird.f32 %v47
  %vm69 = vweird.f32 %v63
  %vm70 = vmor %vm68, %vm69
  %v71 = vsel %vm70, %v63, %v67
  %v72 = vand.u32 2147483647, %v47
  %vm73 = vcmp.eq.f32.partialorder %v72, 8.507059e+37
  %v74 = vand.u32 %v47, 2147483648
  %v75 = vor.u32 1.1754944e-38, %v74
  %v76 = vsel %vm73, %v75, %v71
  %v77 = vmul.f32 1.0, %v76
  %v78 = vmul.f32 %v21, %v62
  %v79 = vmul.f32 %v22, %v77
  %v80 = vlaneseq
  %v81 = vshrl.u32 %v80, 7
  %v82 = vld [vmem:[%s1] sm:$0x1]
  %v83 = vperm.slane %v82, 0
  %vm84 = vcmp.eq.s32.totalorder %v81, %v83
  %v85 = vsel %vm84, 1, 0
  %v86 = vcvt.s32.f32 %v85
  %vm87 = vcmask 130048
  %v89 = vsel %vm87, %v86, 0
  %91 = vmatpush.msra.mxu0 0.0
  %92 = vmatpush.msra.mxu0 0.0
  %93 = vmatpush.msra.mxu0 0.0
  %94 = vmatpush.msra.mxu0 0.0
  %95 = vmatpush.msra.mxu0 0.0
  %96 = vmatpush.msra.mxu0 0.0
  %97 = vmatpush.msra.mxu0 0.0
  %98 = vmatpush.msra.mxu0 0.0
  %99 = vmatpush.msra.mxu0 0.0
  %100 = vmatpush.msra.mxu0 0.0
  %101 = vmatpush.msra.mxu0 0.0
  %102 = vmatpush.msra.mxu0 0.0
  %103 = vmatpush.msra.mxu0 0.0
  %104 = vmatpush.msra.mxu0 0.0
  %105 = vmatpush.msra.mxu0 %v79
  %106 = vmatpush.msra.mxu0 %v78
  %107 = vmatmul.f32.gmra.mxu0 %v89
  %v108 = vpop.f32.mrf.mxu0
  %v109 = vadd.f32 0.0, %v108
  %110 = vdwg.mxu0
  %v111 = vsel %vm87, %v86, 0.0
  %112 = vadd.xlane.f32.xlu0 %v111
  %v113 = vpop.xlane.xlu0 %112
  %v114 = vmax.f32 %v113, 1.0
  %v115 = vrcp.pop %v114
  %v116 = vmul.f32 %v114, %v115
  %v117 = vsub.f32 1.0, %v116
  %v118 = vmul.f32 %v115, %v117
  %v119 = vadd.f32 %v115, %v118
  %vm120 = vweird.f32 %v114
  %vm121 = vweird.f32 %v115
  %vm122 = vmor %vm120, %vm121
  %v123 = vsel %vm122, %v115, %v119
  %v124 = vand.u32 2147483647, %v114
  %vm125 = vcmp.eq.f32.partialorder %v124, 8.507059e+37
  %v126 = vand.u32 %v114, 2147483648
  %v127 = vor.u32 1.1754944e-38, %v126
  %v128 = vsel %vm125, %v127, %v123
  %v129 = vmul.f32 %v109, %v128
  %v130 = vlaneseq
  %v131 = vand.u32 %v130, 127
  %v132 = vld [vmem:[%s2] sm:$0xff]
  %v133 = vld [vmem:[%s2 + $0x8] sm:$0xff]
  %134 = vset.pattern.permute.xlu0 0
  %135 = vperm.xlu0 %134, %v132
  %v136 = vpop.permute.xlu0 %135
  %137 = vset.pattern.permute.xlu0 0
  %138 = vperm.xlu0 %137, %v133
  %v139 = vpop.permute.xlu0 %138
  %vm140 = vcmp.eq.s32.totalorder %v136, %v131
  %vm141 = vcmp.eq.s32.totalorder %v139, %v131
  %v142 = vsel %vm140, 1, 0
  %v143 = vsel %vm141, 1, 0
  %v144 = vcvt.s32.f32 %v142
  %v145 = vcvt.s32.f32 %v143
  %v147 = vsel %vm30, %v144, 0
  %v150 = vsel %vm30, %v145, 0
  %152 = vmatpush.msra.mxu0 0.0
  %153 = vmatpush.msra.mxu0 0.0
  %154 = vmatpush.msra.mxu0 0.0
  %155 = vmatpush.msra.mxu0 0.0
  %156 = vmatpush.msra.mxu0 0.0
  %157 = vmatpush.msra.mxu0 0.0
  %158 = vmatpush.msra.mxu0 0.0
  %159 = vmatpush.msra.mxu0 0.0
  %160 = vmatpush.msra.mxu0 0.0
  %161 = vmatpush.msra.mxu0 0.0
  %162 = vmatpush.msra.mxu0 0.0
  %163 = vmatpush.msra.mxu0 0.0
  %164 = vmatpush.msra.mxu0 0.0
  %165 = vmatpush.msra.mxu0 0.0
  %166 = vmatpush.msra.mxu0 0.0
  %167 = vmatpush.msra.mxu0 %v129
  %168 = vmatmul.f32.gmra.mxu0 %v147
  %v169 = vpop.f32.mrf.mxu0
  %v170 = vadd.f32 0.0, %v169
  %171 = vmatmul.f32.gmra.mxu0 %v150
  %v172 = vpop.f32.mrf.mxu0
  %v173 = vadd.f32 0.0, %v172
  %174 = vdwg.mxu0
  %175 = vst.msk [vmem:[%s5] sm:$0xff] %vm30, %v170
  %176 = vst.msk [vmem:[%s5 + $0x8] sm:$0xff] %vm30, %v173
  // Predicated region
  $region22: #{tpu_custom_call.1} parent=0 // pred_check
    _
  $region23: #{tpu_custom_call.1} parent=0 // pred_check_branch
    %178 = sbr.rel (0) target = $region25
  $region24: #{tpu_custom_call.1} parent=0 // pred_region
    _
  $region25: #{tpu_custom_call.1} parent=0 // pred_fallthru
    _
  // Predicated region
  $region26: #{tpu_custom_call.1} parent=0 // pred_check
    _
  $region27: #{tpu_custom_call.1} parent=0 // pred_check_branch
    %180 = sbr.rel (0) target = $region29
  $region28: #{tpu_custom_call.1} parent=0 // pred_region
    _
  $region29: #{tpu_custom_call.1} parent=0 // pred_fallthru
    _

</llo_original>
